<compile_context>
chip_gen: v6e
topology: v6e:2x2x1
jax: 0.10.0
libtpu: 0.0.40
codegen_flags: <defaults>
</compile_context>

<pallas_src>
import functools

import numpy as np
import jax
import jax.numpy as jnp
from jax.experimental import pallas as pl
from jax.experimental.pallas import tpu as pltpu


def _round_up(x, m):
    return (x + m - 1) // m * m


def _skipgram_matmul_kernel(x_ref, w_ref, out_ref):
    """x_ref:   (TM, E)  bf16 renormed embedding rows
       w_ref:   (E, TN)  bf16 linear-weight tile (pre-transposed once in the wrapper)
       out_ref: (TM, TN) logits tile (f32 by default, optionally bf16)"""
    out_ref[...] = jnp.dot(
        x_ref[...], w_ref[...], preferred_element_type=jnp.float32
    ).astype(out_ref.dtype)


def prepare_linear_weight(linear_weight, *, tn=1024):
    """One-time weight prep (call OUTSIDE the training/inference step).

    Takes the PyTorch-layout (V, E) float32 nn.Linear weight and returns the
    bf16 (E, V_pad) array the kernel streams, so the per-call forward never
    casts / pads / transposes the full table (review item #10).
    """
    V, E = linear_weight.shape
    tn = min(tn, _round_up(V, 128))
    V_pad = _round_up(V, tn)
    w = linear_weight.astype(jnp.bfloat16).T            # (E, V)
    if V_pad != V:
        w = jnp.pad(w, ((0, 0), (0, V_pad - V)))        # zero cols -> dropped logits
    return w


def skipgram_forward(indices, embed_weight, linear_weight_t, *, vocab_size,
                     max_norm=1.0, tm=256, tn=1024,
                     out_dtype=jnp.float32, permute_output=True):
    """
    Args:
      indices:         (B,) or (B, C) int32 token ids
      embed_weight:    (V, E) float32 embedding table
      linear_weight_t: (E, V_pad) bf16 prepared weight (see prepare_linear_weight)
      vocab_size:      V (static), needed because linear_weight_t is padded
    Returns:
      (B, V) if indices is 1-D, else (B, V, C) (or (B, C, V) if permute_output=False).
    """
    V = vocab_size
    V_tab, E = embed_weight.shape
    E_w, V_pad = linear_weight_t.shape
    assert V_tab == V and E_w == E, "embedding / prepared-weight shape mismatch"

    squeeze = indices.ndim == 1
    idx2d = indices[:, None] if squeeze else indices                 # (B, C)
    B, C = idx2d.shape
    N = B * C

    # Clamp tile sizes for tiny problems; keep sublane/lane alignment.
    tm = min(tm, _round_up(N, 16))          # bf16 sublane tile = 16 rows
    tn = min(tn, _round_up(V, 128))         # lane-dense output tile
    assert tm % 16 == 0 and tn % 128 == 0
    assert V_pad % tn == 0 and V_pad >= V, "prepared weight padding incompatible with tn"
    N_pad = _round_up(N, tm)

    flat_idx = idx2d.reshape(-1).astype(jnp.int32)

    # Embedding lookup + max_norm clip on the looked-up rows (small (N, E) op;
    # XLA fuses gather + clip + cast).  Matches PyTorch's forward output; the
    # in-place table renorm side effect is not modeled (see TODO above).
    x = jnp.take(embed_weight, flat_idx, axis=0).astype(jnp.float32)  # (N, E)
    if max_norm is not None:
        norm = jnp.sqrt(jnp.sum(x * x, axis=-1, keepdims=True))
        scale = jnp.where(norm > max_norm, max_norm / (norm + 1e-7), 1.0)
        x = x * scale
    x = x.astype(jnp.bfloat16)
    if N_pad != N:
        x = jnp.pad(x, ((0, N_pad - N), (0, 0)))                      # zero rows, sliced off later

    # Grid: V tiles outermost ("parallel", >= 2 for realistic vocab -> both v7x TCs
    # busy), N tiles innermost.  The weight tile's block index depends only on the
    # V axis, so each weight tile is fetched from HBM exactly once.
    grid = (V_pad // tn, N_pad // tm)

    # VMEM estimate: double-buffered weight + X tiles + output tile, plus headroom;
    # capped by the actual per-core VMEM of this generation (64 MiB on v7x,
    # 128 MiB on v5e/v6e).
    out_bytes = np.dtype(out_dtype).itemsize
    vmem_bytes = (2 * E * tn * 2          # weight tile, bf16, double-buffered
                  + 2 * tm * E * 2        # activation tile, bf16, double-buffered
                  + 2 * tm * tn * out_bytes
                  + (2 << 20))            # headroom
    try:
        vmem_cap = int(pltpu.get_tpu_info().vmem_capacity_bytes)
    except Exception:
        vmem_cap = 64 << 20
    vmem_limit = int(min(max(vmem_bytes, 8 << 20), vmem_cap))

    logits = pl.pallas_call(
        _skipgram_matmul_kernel,
        out_shape=jax.ShapeDtypeStruct((N_pad, V_pad), out_dtype),
        grid_spec=pltpu.PrefetchScalarGridSpec(
            num_scalar_prefetch=0,
            grid=grid,
            in_specs=[
                pl.BlockSpec((tm, E), lambda j, i: (i, 0)),   # activations
                pl.BlockSpec((E, tn), lambda j, i: (0, j)),   # weight: streamed once
            ],
            out_specs=pl.BlockSpec((tm, tn), lambda j, i: (i, j)),
        ),
        compiler_params=pltpu.CompilerParams(
            dimension_semantics=("parallel", "parallel"),
            vmem_limit_bytes=vmem_limit,
        ),
    )(x, linear_weight_t)                                              # (N_pad, V_pad)

    logits = logits[:N, :V].reshape(B, C, V)
    if squeeze:
        return logits[:, 0, :]                                         # (B, V)
    if permute_output:
        # Matches PyTorch's .permute(0, 2, 1).  NOTE: this is a full HBM
        # round-trip of the logits; consumers that can take (B, C, V) should
        # pass permute_output=False (review item #2).
        return jnp.transpose(logits, (0, 2, 1))                        # (B, V, C)
    return logits                                                      # (B, C, V)


def _reference(indices, embed_weight, linear_weight, max_norm=1.0):
    """Pure-JAX reference mirroring the kernel's numerics (bf16 MXU inputs)."""
    emb = jnp.take(embed_weight, indices, axis=0).astype(jnp.float32)
    if max_norm is not None:
        norm = jnp.sqrt(jnp.sum(emb * emb, axis=-1, keepdims=True))
        scale = jnp.where(norm > max_norm, max_norm / (norm + 1e-7), 1.0)
        emb = emb * scale
    x = jnp.einsum("...e,ve->...v",
                   emb.astype(jnp.bfloat16),
                   linear_weight.astype(jnp.bfloat16),
                   preferred_element_type=jnp.float32)
    if x.ndim == 3:
        return jnp.transpose(x, (0, 2, 1))
    return x


if __name__ == "__main__":
    key = jax.random.PRNGKey(0)
    k_emb, k_lin, k_idx = jax.random.split(key, 3)

    vocab_size = 1000      # non-multiple of the V tile -> exercises padding
    embed_dim = 128
    batch_size = 3
    context_size = 9       # N = 27 -> padded to 32 with tm=16 (2 N tiles)

    embed_weight = jax.random.normal(k_emb, (vocab_size, embed_dim), jnp.float32)
    bound = 1.0 / (embed_dim ** 0.5)
    linear_weight = jax.random.uniform(
        k_lin, (vocab_size, embed_dim), jnp.float32, -bound, bound)
    indices = jax.random.randint(
        k_idx, (batch_size, context_size), 0, vocab_size, jnp.int32)

    tn = 512  # -> V_pad = 1024, two parallel V tiles
    # One-time weight prep (bf16 cast + transpose + pad), hoisted out of the step.
    w_t = jax.block_until_ready(prepare_linear_weight(linear_weight, tn=tn))

    fwd = jax.jit(
        skipgram_forward,
        static_argnames=("vocab_size", "max_norm", "tm", "tn",
                         "out_dtype", "permute_output"))

    # 2-D input path: (B, C) -> (B, V, C)
    out = fwd(indices, embed_weight, w_t,
              vocab_size=vocab_size, max_norm=1.0, tm=16, tn=tn)
    out = jax.block_until_ready(out)
    ref = _reference(indices, embed_weight, linear_weight, max_norm=1.0)
    assert out.shape == (batch_size, vocab_size, context_size), out.shape
    assert jnp.allclose(out, ref, atol=2e-3, rtol=2e-3), "mismatch vs reference (2D)"

    # 1-D input path: (B,) -> (B, V)
    out1d = fwd(indices[:, 0], embed_weight, w_t,
                vocab_size=vocab_size, max_norm=1.0, tm=16, tn=tn)
    out1d = jax.block_until_ready(out1d)
    ref1d = _reference(indices[:, 0], embed_weight, linear_weight, max_norm=1.0)
    assert out1d.shape == (batch_size, vocab_size), out1d.shape
    assert jnp.allclose(out1d, ref1d, atol=2e-3, rtol=2e-3), "mismatch vs reference (1D)"

    print("KERNEL_OK")
</pallas_src>

<mosaic_0001>
module attributes {stable_mosaic.version = 11 : i64} {
  func.func @_skipgram_matmul_kernel(%arg0: i32, %arg1: i32, %arg2: memref<16x128xbf16, #tpu.memory_space<vmem>>, %arg3: memref<128x512xbf16, #tpu.memory_space<vmem>>, %arg4: memref<16x512xf32, #tpu.memory_space<vmem>>) attributes {dimension_semantics = [#tpu.dimension_semantics<parallel>, #tpu.dimension_semantics<parallel>], iteration_bounds = array<i64: 2, 2>, scalar_prefetch = 0 : i64, scratch_operands = 0 : i64, tpu.core_type = #tpu.core_type<tc>, window_params = [{transform_indices = @transform_0, window_bounds = array<i64: 16, 128>}, {transform_indices = @transform_1, window_bounds = array<i64: 128, 512>}, {transform_indices = @transform_2, window_bounds = array<i64: 16, 512>}]} {
    %c0 = arith.constant 0 : index
    %c0_0 = arith.constant 0 : index
    %0 = vector.load %arg2[%c0, %c0_0] : memref<16x128xbf16, #tpu.memory_space<vmem>>, vector<16x128xbf16>
    %c0_1 = arith.constant 0 : index
    %c0_2 = arith.constant 0 : index
    %1 = vector.load %arg3[%c0_1, %c0_2] : memref<128x512xbf16, #tpu.memory_space<vmem>>, vector<128x512xbf16>
    %cst = arith.constant dense<0.000000e+00> : vector<16x512xf32>
    %2 = tpu.matmul %0, %1, %cst {dimension_numbers = #tpu.dot_dimension_numbers<[1], [0], [0], [1], [0, 0, 1, 1], [], []>} : vector<16x128xbf16>, vector<128x512xbf16>, vector<16x512xf32> -> vector<16x512xf32>
    %c0_3 = arith.constant 0 : index
    %c0_4 = arith.constant 0 : index
    %3 = vector.load %arg4[%c0_3, %c0_4] : memref<16x512xf32, #tpu.memory_space<vmem>>, vector<16x512xf32>
    tpu.vector_store %arg4[%c0_3, %c0_4], %2 {strides = array<i32>} : memref<16x512xf32, #tpu.memory_space<vmem>>, vector<16x512xf32>,
    return
  }
  func.func @transform_0(%arg0: i32, %arg1: i32) -> (i32, i32) {
    %c0_i32 = arith.constant 0 : i32
    %c0_i32_0 = arith.constant 0 : i32
    return %arg1, %c0_i32 : i32, i32
  }
  func.func @transform_1(%arg0: i32, %arg1: i32) -> (i32, i32) {
    %c0_i32 = arith.constant 0 : i32
    %c0_i32_0 = arith.constant 0 : i32
    return %c0_i32, %arg0 : i32, i32
  }
  func.func @transform_2(%arg0: i32, %arg1: i32) -> (i32, i32) {
    %c0_i32 = arith.constant 0 : i32
    return %arg1, %arg0 : i32, i32
  }
}

</mosaic_0001>

<llo_original>
// kernel: skipgram_forward.1
$region0: #{skipgram_forward.1}
  #allocation0 [shape = 'u32[]', space=smem, size = 0x4, offset = 0x4, fixed_abs, tag = 'smem constant byte address 0x4 - core index']
  #allocation1 [shape = 'u32[144,128]{1,0:T(1,128)}', space=vmem, size = 0x12000, scoped, tag = 'internal scratch']
  %s0 = inlined_call_operand.vmem [shape: bf16[32,128], index: 0, kind: input, shape index: {}]
  %s1 = inlined_call_operand.hbm [shape: bf16[128,1024], index: 1, kind: input, shape index: {}]
  %s2 = inlined_call_operand.vmem [shape: f32[32,1024], index: 2, kind: output, shape index: {}]
  %s3 = sld [smem:[#allocation0]]
  $region64: #{skipgram_forward.1} parent=0
    _
  %s5 = ssub.s32 1, %s3
  %s6 = scalar_select 0, %s5, %s3
  $region1: #{skipgram_forward.1} parent=0
    #allocation2 [shape = 'u8[262144]{0}', space=vmem, size = 0x40000, scoped, tag = 'input window, operand 1']
    #allocation3 [shape = 's32[2]{0}', space=sflag, size = 0x8, scoped, tag = 'scoped memory for skipgram_forward.1']
    #allocation4 [shape = 'u8[65536]{0}', space=vmem, size = 0x10000, scoped, tag = 'output window, operand 0']
    %7 = vsyncpa [#allocation3], 0
    %s8 = scalar_lea.sflag [#allocation3], 1
    %9 = vsyncpa %s8, 0
    loop: start=0, step=1, limit=6
    $region2: #{skipgram_forward.1} parent=1 // loop_pre_header
      _
    $region3: #{skipgram_forward.1} parent=1 // loop_header
      %s11 = sphi 0, %s15
      %p12 = scmp.ge.s32.totalorder %s11, 6
      %s18 = sphi 0, %s30
      %s19 = sphi 0, %s26
      %s20 = sphi 0, %s18
      %s21 = sphi 0, %s19
      %s22 = sphi 0, %s20
      %s23 = sphi 0, %s21
      %s33 = sphi 0, %s35
      %s36 = sphi 0, %s33
      %s37 = sphi 0, %s36
      %s53 = sphi 0, %s37
      %s59 = sphi 0, %s61
      %s62 = sphi 0, %s59
      %s63 = sphi 0, %s62
      %s79 = sphi 0, %s63
      %s87 = sphi 0, %s89
      %s90 = sphi 0, %s87
      %s91 = sphi 0, %s90
      %s107 = sphi 0, %s91
    $region4: #{skipgram_forward.1} parent=1 // loop_header_branch
      %14 = sbr.rel (%p12) target = $region8
    $region5: #{skipgram_forward.1} parent=1 // loop_body
      %s16 = ssub.s32 %s11, 1
      %s17 = ssub.s32 %s11, 2
      %s24 = sadd.s32 1, %s19
      %p25 = scmp.ge.s32.totalorder %s24, 2
      %s26 = scalar_select %p25, 0, %s24
      %s27 = sadd.s32 1, %s18
      %s28 = scalar_select %p25, %s27, %s18
      %p29 = scmp.ge.s32.totalorder %s28, 2
      %s30 = scalar_select %p29, 0, %s28
      %s31 = ssub.s32 %s19, %s26
      %p32 = scmp.eq.s32.totalorder %s31, 0
      %s34 = sadd.s32 %s33, 1
      %s35 = scalar_select %p32, %s33, %s34
      %p38 = pneg %p32
      %p39 = scmp.eq.s32.totalorder %s11, 3
      %p40 = por %p38, %p39
      %p41 = scmp.ne.s32.totalorder %s33, %s36
      %p42 = scmp.eq.s32.totalorder %s11, 0
      %p43 = por %p41, %p42
      %p44 = scmp.ne.s32.totalorder %s33, %s36
      %p45 = scmp.eq.s32.totalorder %s16, 3
      %p46 = por %p44, %p45
      %p47 = scmp.ne.s32.totalorder %s36, %s37
      %p48 = scmp.eq.s32.totalorder %s16, 0
      %p49 = por %p47, %p48
      %p50 = scmp.ne.s32.totalorder %s36, %s37
      %p51 = scmp.eq.s32.totalorder %s17, 3
      %p52 = por %p50, %p51
      %p54 = scmp.ne.s32.totalorder %s37, %s53
      %p55 = scmp.eq.s32.totalorder %s17, 0
      %p56 = por %p54, %p55
      %s57 = ssub.s32 %s18, %s30
      %p58 = scmp.eq.s32.totalorder %s57, 0
      %s60 = sadd.s32 %s59, 1
      %s61 = scalar_select %p58, %s59, %s60
      %p64 = pneg %p58
      %p65 = scmp.eq.s32.totalorder %s11, 3
      %p66 = por %p64, %p65
      %p67 = scmp.ne.s32.totalorder %s59, %s62
      %p68 = scmp.eq.s32.totalorder %s11, 0
      %p69 = por %p67, %p68
      %p70 = scmp.ne.s32.totalorder %s59, %s62
      %p71 = scmp.eq.s32.totalorder %s16, 3
      %p72 = por %p70, %p71
      %p73 = scmp.ne.s32.totalorder %s62, %s63
      %p74 = scmp.eq.s32.totalorder %s16, 0
      %p75 = por %p73, %p74
      %p76 = scmp.ne.s32.totalorder %s62, %s63
      %p77 = scmp.eq.s32.totalorder %s17, 3
      %p78 = por %p76, %p77
      %p80 = scmp.ne.s32.totalorder %s63, %s79
      %p81 = scmp.eq.s32.totalorder %s17, 0
      %p82 = por %p80, %p81
      %s83 = ssub.s32 %s19, %s26
      %s84 = ssub.s32 %s18, %s30
      %s85 = sor.u32 %s83, %s84
      %p86 = scmp.eq.s32.totalorder %s85, 0
      %s88 = sadd.s32 %s87, 1
      %s89 = scalar_select %p86, %s87, %s88
      %p92 = pneg %p86
      %p93 = scmp.eq.s32.totalorder %s11, 3
      %p94 = por %p92, %p93
      %p95 = scmp.ne.s32.totalorder %s87, %s90
      %p96 = scmp.eq.s32.totalorder %s11, 0
      %p97 = por %p95, %p96
      %p98 = scmp.ne.s32.totalorder %s87, %s90
      %p99 = scmp.eq.s32.totalorder %s16, 3
      %p100 = por %p98, %p99
      %p101 = scmp.ne.s32.totalorder %s90, %s91
      %p102 = scmp.eq.s32.totalorder %s16, 0
      %p103 = por %p101, %p102
      %p104 = scmp.ne.s32.totalorder %s90, %s91
      %p105 = scmp.eq.s32.totalorder %s17, 3
      %p106 = por %p104, %p105
      %p108 = scmp.ne.s32.totalorder %s91, %s107
      %p109 = scmp.eq.s32.totalorder %s17, 0
      %p110 = por %p108, %p109
      %p111 = scmp.le.s32.totalorder 1, %s11
      %p112 = scmp.lt.s32.totalorder %s11, 5
      %p113 = pnand %p111, %p112
      %p114 = pneg %p113
      // Predicated region
      $region9: #{skipgram_forward.1} parent=5 // pred_check
        _
      $region10: #{skipgram_forward.1} parent=5 // pred_check_branch
        %116 = sbr.rel (%p113) target = $region12
      $region11: #{skipgram_forward.1} parent=5 // pred_region
        %s117 = ssub.s32 %s11, 1
      $region12: #{skipgram_forward.1} parent=5 // pred_fallthru
        _
      %p118 = scmp.lt.s32.totalorder %s11, 4
      // Predicated region
      $region13: #{skipgram_forward.1} parent=5 // pred_check
        %p119 = pneg %p118
      $region14: #{skipgram_forward.1} parent=5 // pred_check_branch
        %121 = sbr.rel (%p119) target = $region16
      $region15: #{skipgram_forward.1} parent=5 // pred_region
        // Predicated region
        $region17: #{skipgram_forward.1} parent=15 // pred_check
          %p122 = pneg %p43
        $region18: #{skipgram_forward.1} parent=15 // pred_check_branch
          %124 = sbr.rel (%p122) target = $region20
        $region19: #{skipgram_forward.1} parent=15 // pred_region
          %s125 = smul.u32 2, %s19
          %p126 = scmp.lt.s32.totalorder %s125, 3
          %s127 = scalar_select %p126, %s125, 3
          %s128 = smul.addr %s127, 4
          %s129 = scalar_lea.vmem %s0, %s128
          %s130 = smul.u32 2, %s19
        $region20: #{skipgram_forward.1} parent=15 // pred_fallthru
          _
        // Predicated region
        $region21: #{skipgram_forward.1} parent=15 // pred_check
          %p131 = pneg %p69
        $region22: #{skipgram_forward.1} parent=15 // pred_check_branch
          %133 = sbr.rel (%p131) target = $region24
        $region23: #{skipgram_forward.1} parent=15 // pred_region
          %s134 = sand.u32 %s59, 1
          %s135 = scalar_lea.sflag [#allocation3], %s134
          %s136 = sand.u32 %s59, 1
          %s137 = smul.addr %s136, 256
          %s138 = scalar_lea.vmem [#allocation2], %s137
          %s139 = smul.u32 4, %s18
          %s141 = ssub.s32 4096, 4096
          %142 = vsyncadd %s135, %s141
          %s143 = smul.addr %s139, 64
          %s144 = scalar_lea.hbm %s1, %s143
          %s145 = sshll.u32 %s138, 4
          %s146 = int_to_ptr.vmem [resolvable:$true] %s145
          %151 = dma.hbm_to_vmem [thread:$0]  %s144, 4096, %s146, %s135, 512, 256, 16
        $region24: #{skipgram_forward.1} parent=15 // pred_fallthru
          _
      $region16: #{skipgram_forward.1} parent=5 // pred_fallthru
        _
      %p152 = scmp.le.s32.totalorder 1, %s11
      %p153 = scmp.lt.s32.totalorder %s11, 5
      %p154 = pnand %p152, %p153
      %p155 = pneg %p154
      // Predicated region
      $region25: #{skipgram_forward.1} parent=5 // pred_check
        _
      $region26: #{skipgram_forward.1} parent=5 // pred_check_branch
        %157 = sbr.rel (%p154) target = $region28
      $region27: #{skipgram_forward.1} parent=5 // pred_region
        %s158 = ssub.s32 %s11, 1
        %s159 = sand.u32 %s62, 1
        %s160 = scalar_lea.sflag [#allocation3], %s159
        %s161 = sand.u32 %s62, 1
        %s162 = smul.addr %s161, 256
        %s163 = scalar_lea.vmem [#allocation2], %s162
        // Predicated region
        $region29: #{skipgram_forward.1} parent=27 // pred_check
          %p164 = pneg %p75
        $region30: #{skipgram_forward.1} parent=27 // pred_check_branch
          %166 = sbr.rel (%p164) target = $region32
        $region31: #{skipgram_forward.1} parent=27 // pred_region
          %167 = dma.done %s160, 4096
        $region32: #{skipgram_forward.1} parent=27 // pred_fallthru
          _
        %s168 = smul.u32 2, %s21
        %p169 = scmp.lt.s32.totalorder %s168, 3
        %s170 = scalar_select %p169, %s168, 3
        %s171 = smul.addr %s170, 4
        %s172 = scalar_lea.vmem %s0, %s171
        %p173 = pneg %p49
        %p174 = pneg %p46
        %s175 = sand.u32 %s62, 1
        %s176 = scalar_lea.sflag [#allocation3], %s175
        %s177 = sand.u32 %s62, 1
        %s178 = smul.addr %s177, 256
        %s179 = scalar_lea.vmem [#allocation2], %s178
        %p180 = pneg %p75
        %p181 = pneg %p72
        %p182 = pneg %p103
        %p183 = pneg %p100
        %s184 = sand.u32 %s90, 1
        %s185 = sand.u32 %s90, 1
        %s186 = smul.addr %s185, 64
        %s187 = scalar_lea.vmem [#allocation4], %s186
        %s188 = smul.u32 2, %s21
        %p189 = scmp.lt.s32.totalorder %s188, 3
        %s190 = scalar_select %p189, %s188, 3
        %s191 = smul.addr %s190, 4
        %s192 = scalar_lea.vmem %s0, %s191
        %s193 = smul.u32 2, %s21
        %s194 = smul.u32 4, %s20
        %s195 = smul.u32 2, %s21
        %s196 = smul.u32 4, %s20
        %v198 = vld [vmem:[%s192] sm:$0xf]
        %v199 = vld [vmem:[%s192 + $0x4] sm:$0xf]
        %v200 = vld [vmem:[%s163] sm:$0xff]
        %v201 = vld [vmem:[%s163 + $0x8] sm:$0xff]
        %v202 = vld [vmem:[%s163 + $0x10] sm:$0xff]
        %v203 = vld [vmem:[%s163 + $0x18] sm:$0xff]
        %v204 = vld [vmem:[%s163 + $0x20] sm:$0xff]
        %v205 = vld [vmem:[%s163 + $0x28] sm:$0xff]
        %v206 = vld [vmem:[%s163 + $0x30] sm:$0xff]
        %v207 = vld [vmem:[%s163 + $0x38] sm:$0xff]
        %v208 = vld [vmem:[%s163 + $0x40] sm:$0xff]
        %v209 = vld [vmem:[%s163 + $0x48] sm:$0xff]
        %v210 = vld [vmem:[%s163 + $0x50] sm:$0xff]
        %v211 = vld [vmem:[%s163 + $0x58] sm:$0xff]
        %v212 = vld [vmem:[%s163 + $0x60] sm:$0xff]
        %v213 = vld [vmem:[%s163 + $0x68] sm:$0xff]
        %v214 = vld [vmem:[%s163 + $0x70] sm:$0xff]
        %v215 = vld [vmem:[%s163 + $0x78] sm:$0xff]
        %v216 = vld [vmem:[%s163 + $0x80] sm:$0xff]
        %v217 = vld [vmem:[%s163 + $0x88] sm:$0xff]
        %v218 = vld [vmem:[%s163 + $0x90] sm:$0xff]
        %v219 = vld [vmem:[%s163 + $0x98] sm:$0xff]
        %v220 = vld [vmem:[%s163 + $0xa0] sm:$0xff]
        %v221 = vld [vmem:[%s163 + $0xa8] sm:$0xff]
        %v222 = vld [vmem:[%s163 + $0xb0] sm:$0xff]
        %v223 = vld [vmem:[%s163 + $0xb8] sm:$0xff]
        %v224 = vld [vmem:[%s163 + $0xc0] sm:$0xff]
        %v225 = vld [vmem:[%s163 + $0xc8] sm:$0xff]
        %v226 = vld [vmem:[%s163 + $0xd0] sm:$0xff]
        %v227 = vld [vmem:[%s163 + $0xd8] sm:$0xff]
        %v228 = vld [vmem:[%s163 + $0xe0] sm:$0xff]
        %v229 = vld [vmem:[%s163 + $0xe8] sm:$0xff]
        %v230 = vld [vmem:[%s163 + $0xf0] sm:$0xff]
        %v231 = vld [vmem:[%s163 + $0xf8] sm:$0xff]
        %v234 = vunpack.c.l.b16 %v198
        %v235 = vunpack.c.l.b16 %v199
        %v236 = vpack.c.b16 %v235, %v234
        %v270 = vunpack.c.l.b16 %v200
        %v271 = vunpack.c.h.b16 %v200
        %v272 = vunpack.c.l.b16 %v201
        %v273 = vunpack.c.h.b16 %v201
        %v274 = vunpack.c.l.b16 %v202
        %v275 = vunpack.c.h.b16 %v202
        %v276 = vunpack.c.l.b16 %v203
        %v277 = vunpack.c.h.b16 %v203
        %v278 = vunpack.c.l.b16 %v204
        %v279 = vunpack.c.h.b16 %v204
        %v280 = vunpack.c.l.b16 %v205
        %v281 = vunpack.c.h.b16 %v205
        %v282 = vunpack.c.l.b16 %v206
        %v283 = vunpack.c.h.b16 %v206
        %v284 = vunpack.c.l.b16 %v207
        %v285 = vunpack.c.h.b16 %v207
        %v286 = vunpack.c.l.b16 %v208
        %v287 = vunpack.c.h.b16 %v208
        %v288 = vunpack.c.l.b16 %v209
        %v289 = vunpack.c.h.b16 %v209
        %v290 = vunpack.c.l.b16 %v210
        %v291 = vunpack.c.h.b16 %v210
        %v292 = vunpack.c.l.b16 %v211
        %v293 = vunpack.c.h.b16 %v211
        %v294 = vunpack.c.l.b16 %v212
        %v295 = vunpack.c.h.b16 %v212
        %v296 = vunpack.c.l.b16 %v213
        %v297 = vunpack.c.h.b16 %v213
        %v298 = vunpack.c.l.b16 %v214
        %v299 = vunpack.c.h.b16 %v214
        %v300 = vunpack.c.l.b16 %v215
        %v301 = vunpack.c.h.b16 %v215
        %v302 = vunpack.c.l.b16 %v216
        %v303 = vunpack.c.h.b16 %v216
        %v304 = vunpack.c.l.b16 %v217
        %v305 = vunpack.c.h.b16 %v217
        %v306 = vunpack.c.l.b16 %v218
        %v307 = vunpack.c.h.b16 %v218
        %v308 = vunpack.c.l.b16 %v219
        %v309 = vunpack.c.h.b16 %v219
        %v310 = vunpack.c.l.b16 %v220
        %v311 = vunpack.c.h.b16 %v220
        %v312 = vunpack.c.l.b16 %v221
        %v313 = vunpack.c.h.b16 %v221
        %v314 = vunpack.c.l.b16 %v222
        %v315 = vunpack.c.h.b16 %v222
        %v316 = vunpack.c.l.b16 %v223
        %v317 = vunpack.c.h.b16 %v223
        %v318 = vunpack.c.l.b16 %v224
        %v319 = vunpack.c.h.b16 %v224
        %v320 = vunpack.c.l.b16 %v225
        %v321 = vunpack.c.h.b16 %v225
        %v322 = vunpack.c.l.b16 %v226
        %v323 = vunpack.c.h.b16 %v226
        %v324 = vunpack.c.l.b16 %v227
        %v325 = vunpack.c.h.b16 %v227
        %v326 = vunpack.c.l.b16 %v228
        %v327 = vunpack.c.h.b16 %v228
        %v328 = vunpack.c.l.b16 %v229
        %v329 = vunpack.c.h.b16 %v229
        %v330 = vunpack.c.l.b16 %v230
        %v331 = vunpack.c.h.b16 %v230
        %v332 = vunpack.c.l.b16 %v231
        %v333 = vunpack.c.h.b16 %v231
        %v334 = vpack.c.b16 %v274, %v270
        %v335 = vpack.c.b16 %v275, %v271
        %v336 = vpack.c.b16 %v276, %v272
        %v337 = vpack.c.b16 %v277, %v273
        %v338 = vpack.c.b16 %v282, %v278
        %v339 = vpack.c.b16 %v283, %v279
        %v340 = vpack.c.b16 %v284, %v280
        %v341 = vpack.c.b16 %v285, %v281
        %v342 = vpack.c.b16 %v290, %v286
        %v343 = vpack.c.b16 %v291, %v287
        %v344 = vpack.c.b16 %v292, %v288
        %v345 = vpack.c.b16 %v293, %v289
        %v346 = vpack.c.b16 %v298, %v294
        %v347 = vpack.c.b16 %v299, %v295
        %v348 = vpack.c.b16 %v300, %v296
        %v349 = vpack.c.b16 %v301, %v297
        %v350 = vpack.c.b16 %v306, %v302
        %v351 = vpack.c.b16 %v307, %v303
        %v352 = vpack.c.b16 %v308, %v304
        %v353 = vpack.c.b16 %v309, %v305
        %v354 = vpack.c.b16 %v314, %v310
        %v355 = vpack.c.b16 %v315, %v311
        %v356 = vpack.c.b16 %v316, %v312
        %v357 = vpack.c.b16 %v317, %v313
        %v358 = vpack.c.b16 %v322, %v318
        %v359 = vpack.c.b16 %v323, %v319
        %v360 = vpack.c.b16 %v324, %v320
        %v361 = vpack.c.b16 %v325, %v321
        %v362 = vpack.c.b16 %v330, %v326
        %v363 = vpack.c.b16 %v331, %v327
        %v364 = vpack.c.b16 %v332, %v328
        %v365 = vpack.c.b16 %v333, %v329
        %398 = vmatprep.subr.bf16.mxu0 %v363
        %399 = vmatpush1.bf16.msra.mxu0 %v362
        %400 = vmatprep.subr.bf16.mxu0 %v359
        %401 = vmatpush1.bf16.msra.mxu0 %v358
        %402 = vmatprep.subr.bf16.mxu0 %v355
        %403 = vmatpush1.bf16.msra.mxu0 %v354
        %404 = vmatprep.subr.bf16.mxu0 %v351
        %405 = vmatpush1.bf16.msra.mxu0 %v350
        %406 = vmatprep.subr.bf16.mxu0 %v347
        %407 = vmatpush1.bf16.msra.mxu0 %v346
        %408 = vmatprep.subr.bf16.mxu0 %v343
        %409 = vmatpush1.bf16.msra.mxu0 %v342
        %410 = vmatprep.subr.bf16.mxu0 %v339
        %411 = vmatpush1.bf16.msra.mxu0 %v338
        %412 = vmatprep.subr.bf16.mxu0 %v335
        %413 = vmatpush1.bf16.msra.mxu0 %v334
        %414 = vmatprep.subr.bf16.mxu0 0
        %415 = vmatpush2.bf16.msra.mxu0 0
        %416 = vmatprep.subr.bf16.mxu0 0
        %417 = vmatpush2.bf16.msra.mxu0 0
        %418 = vmatprep.subr.bf16.mxu0 0
        %419 = vmatpush2.bf16.msra.mxu0 0
        %420 = vmatprep.subr.bf16.mxu0 0
        %421 = vmatpush2.bf16.msra.mxu0 0
        %422 = vmatprep.subr.bf16.mxu0 0
        %423 = vmatpush2.bf16.msra.mxu0 0
        %424 = vmatprep.subr.bf16.mxu0 0
        %425 = vmatpush2.bf16.msra.mxu0 0
        %426 = vmatprep.subr.bf16.mxu0 0
        %427 = vmatpush2.bf16.msra.mxu0 0
        %428 = vmatprep.subr.bf16.mxu0 0
        %429 = vmatpush2.bf16.msra.mxu0 0
        %430 = vmatprep.mubr.bf16.mxu0 0
        %431 = vmatmul.mubr.bf16.gmra.mxu0 %v236
        %v432 = vpop.f32.mrf.mxu0
        %v433 = vadd.f32 0.0, %v432
        %v434 = vpop.f32.mrf.mxu0
        %v435 = vadd.f32 0.0, %v434
        %v436 = vpop.f32.mrf.mxu0
        %v437 = vadd.f32 0.0, %v436
        %v438 = vpop.f32.mrf.mxu0
        %v439 = vadd.f32 0.0, %v438
        %440 = vdwg.mxu0
        %441 = vmatprep.subr.bf16.mxu0 %v365
        %442 = vmatpush1.bf16.msra.mxu0 %v364
        %443 = vmatprep.subr.bf16.mxu0 %v361
        %444 = vmatpush1.bf16.msra.mxu0 %v360
        %445 = vmatprep.subr.bf16.mxu0 %v357
        %446 = vmatpush1.bf16.msra.mxu0 %v356
        %447 = vmatprep.subr.bf16.mxu0 %v353
        %448 = vmatpush1.bf16.msra.mxu0 %v352
        %449 = vmatprep.subr.bf16.mxu0 %v349
        %450 = vmatpush1.bf16.msra.mxu0 %v348
        %451 = vmatprep.subr.bf16.mxu0 %v345
        %452 = vmatpush1.bf16.msra.mxu0 %v344
        %453 = vmatprep.subr.bf16.mxu0 %v341
        %454 = vmatpush1.bf16.msra.mxu0 %v340
        %455 = vmatprep.subr.bf16.mxu0 %v337
        %456 = vmatpush1.bf16.msra.mxu0 %v336
        %457 = vmatprep.subr.bf16.mxu0 0
        %458 = vmatpush2.bf16.msra.mxu0 0
        %459 = vmatprep.subr.bf16.mxu0 0
        %460 = vmatpush2.bf16.msra.mxu0 0
        %461 = vmatprep.subr.bf16.mxu0 0
        %462 = vmatpush2.bf16.msra.mxu0 0
        %463 = vmatprep.subr.bf16.mxu0 0
        %464 = vmatpush2.bf16.msra.mxu0 0
        %465 = vmatprep.subr.bf16.mxu0 0
        %466 = vmatpush2.bf16.msra.mxu0 0
        %467 = vmatprep.subr.bf16.mxu0 0
        %468 = vmatpush2.bf16.msra.mxu0 0
        %469 = vmatprep.subr.bf16.mxu0 0
        %470 = vmatpush2.bf16.msra.mxu0 0
        %471 = vmatprep.subr.bf16.mxu0 0
        %472 = vmatpush2.bf16.msra.mxu0 0
        %473 = vmatprep.mubr.bf16.mxu0 0
        %474 = vmatmul.mubr.bf16.gmra.mxu0 %v236
        %v475 = vpop.f32.mrf.mxu0
        %v476 = vadd.f32 0.0, %v475
        %v477 = vpop.f32.mrf.mxu0
        %v478 = vadd.f32 0.0, %v477
        %v479 = vpop.f32.mrf.mxu0
        %v480 = vadd.f32 0.0, %v479
        %v481 = vpop.f32.mrf.mxu0
        %v482 = vadd.f32 0.0, %v481
        %483 = vdwg.mxu0
        %484 = vst [vmem:[%s187] sm:$0xff] %v433
        %485 = vst [vmem:[%s187 + $0x8] sm:$0xff] %v435
        %486 = vst [vmem:[%s187 + $0x10] sm:$0xff] %v476
        %487 = vst [vmem:[%s187 + $0x18] sm:$0xff] %v478
        %488 = vst [vmem:[%s187 + $0x20] sm:$0xff] %v437
        %489 = vst [vmem:[%s187 + $0x28] sm:$0xff] %v439
        %490 = vst [vmem:[%s187 + $0x30] sm:$0xff] %v480
        %491 = vst [vmem:[%s187 + $0x38] sm:$0xff] %v482
        %s492 = sand.u32 %s90, 1
        %s493 = sand.u32 %s90, 1
        %s494 = smul.addr %s493, 64
        %s495 = scalar_lea.vmem [#allocation4], %s494
        // Predicated region
        $region33: #{skipgram_forward.1} parent=27 // pred_check
          %p496 = pneg %p100
        $region34: #{skipgram_forward.1} parent=27 // pred_check_branch
          %498 = sbr.rel (%p496) target = $region36
        $region35: #{skipgram_forward.1} parent=27 // pred_region
          %s499 = smul.u32 2, %s21
          %s500 = smul.u32 4, %s20
          %s501 = smul.addr %s499, 8
          %s502 = sadd.s32 %s500, %s501
          %s503 = smul.addr %s502, 8
          %s504 = scalar_lea.vmem %s2, %s503
          // Predicated region
          $region37: #{skipgram_forward.1} parent=35 // pred_check
            _
          $region38: #{skipgram_forward.1} parent=35 // pred_check_branch
            %506 = sbr.rel (0) target = $region40
          $region39: #{skipgram_forward.1} parent=35 // pred_region
            // Predicated region
            $region41: #{skipgram_forward.1} parent=39 // pred_check
              _
            $region42: #{skipgram_forward.1} parent=39 // pred_check_branch
              %508 = sbr.rel (0) target = $region44
            $region43: #{skipgram_forward.1} parent=39 // pred_region
              loop: start=0, step=1, limit=1
              $region45: #{skipgram_forward.1} parent=43 // loop_pre_header
                _
              $region46: #{skipgram_forward.1} parent=43 // loop_header
                %s510 = sphi 0, %s514
                %p511 = scmp.ge.s32.totalorder %s510, 1
                %s515 = sphi %s495, %s495
                %s516 = sphi %s504, %s504
              $region47: #{skipgram_forward.1} parent=43 // loop_header_branch
                %513 = sbr.rel (%p511) target = $region51
              $region48: #{skipgram_forward.1} parent=43 // loop_body
                %v517 = vld [vmem:[%s515] sm:$0xff]
                %518 = vst [vmem:[%s516] sm:$0xff] %v517
                %v519 = vld [vmem:[%s515 + $0x8] sm:$0xff]
                %520 = vst [vmem:[%s516 + $0x8] sm:$0xff] %v519
                %v521 = vld [vmem:[%s515 + $0x10] sm:$0xff]
                %522 = vst [vmem:[%s516 + $0x10] sm:$0xff] %v521
                %v523 = vld [vmem:[%s515 + $0x18] sm:$0xff]
                %524 = vst [vmem:[%s516 + $0x18] sm:$0xff] %v523
                %v525 = vld [vmem:[%s515 + $0x20] sm:$0xff]
                %526 = vst [vmem:[%s516 + $0x40] sm:$0xff] %v525
                %v527 = vld [vmem:[%s515 + $0x28] sm:$0xff]
                %528 = vst [vmem:[%s516 + $0x48] sm:$0xff] %v527
                %v529 = vld [vmem:[%s515 + $0x30] sm:$0xff]
                %530 = vst [vmem:[%s516 + $0x50] sm:$0xff] %v529
                %v531 = vld [vmem:[%s515 + $0x38] sm:$0xff]
                %532 = vst [vmem:[%s516 + $0x58] sm:$0xff] %v531
              $region49: #{skipgram_forward.1} parent=43 // loop_footer
                %s514 = sadd.s32 1, %s510
              $region50: #{skipgram_forward.1} parent=43 // loop_footer_branch
                %509 = sbr.rel target = $region46
              $region51: #{skipgram_forward.1} parent=43 // loop_exit
                _
            $region44: #{skipgram_forward.1} parent=39 // pred_fallthru
              _
            // Predicated region
            $region52: #{skipgram_forward.1} parent=39 // pred_check
              _
            $region53: #{skipgram_forward.1} parent=39 // pred_check_branch
              %534 = sbr.rel target = $region55
            $region54: #{skipgram_forward.1} parent=39 // pred_region
              _
            $region55: #{skipgram_forward.1} parent=39 // pred_fallthru
              _
          $region40: #{skipgram_forward.1} parent=35 // pred_fallthru
            _
          %535 = vnop
        $region36: #{skipgram_forward.1} parent=27 // pred_fallthru
          _
      $region28: #{skipgram_forward.1} parent=5 // pred_fallthru
        _
      %p536 = scmp.le.s32.totalorder 2, %s11
      // Predicated region
      $region56: #{skipgram_forward.1} parent=5 // pred_check
        %p537 = pneg %p536
      $region57: #{skipgram_forward.1} parent=5 // pred_check_branch
        %539 = sbr.rel (%p537) target = $region59
      $region58: #{skipgram_forward.1} parent=5 // pred_region
        %s540 = ssub.s32 %s11, 2
        // Predicated region
        $region60: #{skipgram_forward.1} parent=58 // pred_check
          %p541 = pneg %p106
        $region61: #{skipgram_forward.1} parent=58 // pred_check_branch
          %543 = sbr.rel (%p541) target = $region63
        $region62: #{skipgram_forward.1} parent=58 // pred_region
          %s544 = sand.u32 %s91, 1
          %s545 = sand.u32 %s91, 1
          %s546 = smul.addr %s545, 64
          %s547 = scalar_lea.vmem [#allocation4], %s546
        $region63: #{skipgram_forward.1} parent=58 // pred_fallthru
          _
      $region59: #{skipgram_forward.1} parent=5 // pred_fallthru
        _
    $region6: #{skipgram_forward.1} parent=1 // loop_footer
      %s15 = sadd.s32 1, %s11
    $region7: #{skipgram_forward.1} parent=1 // loop_footer_branch
      %10 = sbr.rel target = $region3
    $region8: #{skipgram_forward.1} parent=1 // loop_exit
      _
    %548 = vsyncpa [#allocation3], 1
    %s549 = scalar_lea.sflag [#allocation3], 1
    %550 = vsyncpa %s549, 1

</llo_original>
